<compile_context>
chip_gen: v7x
topology: tpu7x:2x2x1
jax: 0.10.0
libtpu: 0.0.40
codegen_flags: <defaults>
</compile_context>

<pallas_src>
import functools

import jax
import jax.numpy as jnp
from jax.experimental import pallas as pl
from jax.experimental.pallas import tpu as pltpu

EPS = 1e-5


def _stats_kernel(pt_ref, w_ref, code_ref, stats_ref, *, cout, c4):
    """Pass 1: conv GEMM + masked per-channel sufficient statistics (partial per tile).

    pt_ref   : (K, TM)       bf16  im2col patches^T (K = 4*Cin, columns = super-pixels)
    w_ref    : (2*C4, K)     bf16  stacked hi/lo sub-pixel weight matrix (C4 = 4*Cout)
    code_ref : (1, TM)       int32 per-column class code: -1 pad, else 2*(a<H) + (b<W)
    stats_ref: (1, 2*Cout,1) f32   rows [0:Cout] = partial sum, rows [Cout:] = partial sum-of-squares
    """
    pt = pt_ref[...]
    yfull = jnp.dot(w_ref[...], pt, preferred_element_type=jnp.float32)   # (2*C4, TM) f32
    y = yfull[:c4] + yfull[c4:]                                           # ~f32-accurate weights

    code = code_ref[...]
    m_ee = code >= 0                          # output pixel (2a,   2b  ) exists (valid column)
    m_eo = (code == 1) | (code == 3)          # output pixel (2a,   2b+1) exists
    m_oe = code >= 2                          # output pixel (2a+1, 2b  ) exists
    m_oo = code == 3                          # output pixel (2a+1, 2b+1) exists

    y2 = y * y
    # Combine the 4 parity classes with VPU selects/adds first -> only 2 cross-lane reductions.
    s = (jnp.where(m_ee, y[0:cout], 0.0) + jnp.where(m_eo, y[cout:2 * cout], 0.0)
         + jnp.where(m_oe, y[2 * cout:3 * cout], 0.0) + jnp.where(m_oo, y[3 * cout:], 0.0))
    q = (jnp.where(m_ee, y2[0:cout], 0.0) + jnp.where(m_eo, y2[cout:2 * cout], 0.0)
         + jnp.where(m_oe, y2[2 * cout:3 * cout], 0.0) + jnp.where(m_oo, y2[3 * cout:], 0.0))

    stats_ref[0, :cout, :] = jnp.sum(s, axis=1, keepdims=True)
    stats_ref[0, cout:, :] = jnp.sum(q, axis=1, keepdims=True)


def _norm_kernel(pt_ref, w_ref, sh_ref, o_ref, *, c4):
    """Pass 2: GEMM with BN-scale-folded weights + shift + ReLU, lane-dense bf16 store."""
    yfull = jnp.dot(w_ref[...], pt_ref[...], preferred_element_type=jnp.float32)  # (2*C4, TM)
    y = yfull[:c4] + yfull[c4:] + sh_ref[...]
    o_ref[...] = jnp.maximum(y, 0.0).astype(jnp.bfloat16)


def _hi_lo_stack(w_f32):
    """f32 matrix -> stacked (hi; lo) bf16 matrix so two cheap MXU halves recover ~f32 weights."""
    hi = w_f32.astype(jnp.bfloat16)
    lo = (w_f32 - hi.astype(jnp.float32)).astype(jnp.bfloat16)
    return jnp.concatenate([hi, lo], axis=0)


def conv_trans_uint_to_odd_forward(x_nchw, w_pt, bias, gamma, beta, *, tile_m=4096):
    """x_nchw: (N, Cin, H, W); w_pt: (Cin, Cout, 3, 3) (PyTorch ConvTranspose2d layout)."""
    N, Cin, H, W = x_nchw.shape
    Cout = w_pt.shape[1]
    OH, OW = 2 * H + 1, 2 * W + 1
    Hp, Wp = H + 1, W + 1               # super-pixel grid; each yields a 2x2 output parity block
    K = 4 * Cin
    C4 = 4 * Cout

    # ---- compact sub-pixel im2col in bf16: P^T (K, M2), rows = (dh, dw, ci), cols = (n, a, b) ----
    xb = x_nchw.astype(jnp.bfloat16)
    xc = jnp.transpose(xb, (1, 0, 2, 3))                        # (Cin, N, H, W)
    xcp = jnp.pad(xc, ((0, 0), (0, 0), (1, 1), (1, 1)))         # zero halo
    pats = [xcp[:, :, 1 - dh:1 - dh + Hp, 1 - dw:1 - dw + Wp]   # x[ci, n, a-dh, b-dw]
            for dh in (0, 1) for dw in (0, 1)]                  # each (Cin, N, Hp, Wp)
    M2 = N * Hp * Wp
    PT = jnp.stack(pats, axis=0).reshape(K, M2)

    # ---- pixel-tile sizing: lane-aligned, target >= ~8 grid steps (pipelining + v7x megacore) ----
    m_ceil = ((M2 + 127) // 128) * 128
    tm = max(128, min((tile_m // 128) * 128, (m_ceil // (8 * 128)) * 128))
    nt = (M2 + tm - 1) // tm
    m_pad = nt * tm
    PT = jnp.pad(PT, ((0, 0), (0, m_pad - M2)))

    # single int32 class-code sideband: -1 for pad columns, else 2*(a < H) + (b < W)
    col = jnp.arange(m_pad, dtype=jnp.int32)
    a_id = (col % (Hp * Wp)) // Wp
    b_id = col % Wp
    code = 2 * (a_id < H).astype(jnp.int32) + (b_id < W).astype(jnp.int32)
    code = jnp.where(col < M2, code, -1).reshape(1, m_pad)

    # ---- sub-pixel weight matrix (4*Cout, 4*Cin), rows = (class, co), cols = (dh, dw, ci) ----
    wf = jnp.transpose(w_pt, (1, 2, 3, 0)).astype(jnp.float32)  # (Cout, kh, kw, Cin)
    wz = jnp.zeros((4, Cout, 2, 2, Cin), jnp.float32)           # [class, co, dh, dw, ci]
    wz = wz.at[0].set(wf[:, ::2, ::2, :])                       # (even,even): taps (2dh, 2dw)
    wz = wz.at[1, :, :, 0, :].set(wf[:, ::2, 1, :])             # (even,odd) : taps (2dh, 1)
    wz = wz.at[2, :, 0, :, :].set(wf[:, 1, ::2, :])             # (odd,even) : taps (1, 2dw)
    wz = wz.at[3, :, 0, 0, :].set(wf[:, 1, 1, :])               # (odd,odd)  : tap  (1, 1)
    Wbig = wz.reshape(C4, K)
    w_stack1 = _hi_lo_stack(Wbig)                               # (2*C4, K) bf16

    # VMEM: double-buffered streamed blocks + f32 intermediates + slack (tracks footprint, not 32MiB)
    step_bytes = tm * (2 * K + 4 + 2 * C4)       # bf16 patches + i32 code + bf16 output per buffer
    vmem_limit = int(min(64 * 2**20, 8 * 2**20 + 4 * step_bytes + 16 * C4 * tm))
    cparams = pltpu.CompilerParams(dimension_semantics=("parallel",),
                                   vmem_limit_bytes=vmem_limit)

    # ---- pass 1: GEMM + masked per-channel sufficient statistics (partial per tile) ----
    stats = pl.pallas_call(
        functools.partial(_stats_kernel, cout=Cout, c4=C4),
        out_shape=jax.ShapeDtypeStruct((nt, 2 * Cout, 1), jnp.float32),
        grid=(nt,),
        in_specs=[pl.BlockSpec((K, tm), lambda i: (0, i)),
                  pl.BlockSpec((2 * C4, K), lambda i: (0, 0)),
                  pl.BlockSpec((1, tm), lambda i: (0, i))],
        out_specs=pl.BlockSpec((1, 2 * Cout, 1), lambda i: (i, 0, 0)),
        compiler_params=cparams,
    )(PT, w_stack1, code)

    # ---- tiny (Cout-sized) reduction + BN affine folding in the wrapper (f32) ----
    count = jnp.float32(N * OH * OW)
    tot = jnp.sum(stats[:, :, 0], axis=0)                       # (2*Cout,)
    mean_dot = tot[:Cout] / count                               # E[conv (no bias)] per channel
    ex2 = tot[Cout:] / count
    var = ex2 - mean_dot * mean_dot                             # biased batch variance
    scale = gamma.astype(jnp.float32) * jax.lax.rsqrt(var + EPS)
    mean_z = mean_dot + bias                                    # conv bias shifts the mean ...
    shift = beta.astype(jnp.float32) + (bias - mean_z) * scale  # ... and cancels here exactly
    scale4 = jnp.tile(scale, 4).reshape(C4, 1)
    shift4 = jnp.tile(shift, 4).reshape(C4, 1)
    w_stack2 = _hi_lo_stack(Wbig * scale4)                      # BN scale folded BEFORE hi/lo split

    # ---- pass 2: GEMM + shift + ReLU, lane-dense bf16 (4*Cout, TM) output blocks ----
    ybig = pl.pallas_call(
        functools.partial(_norm_kernel, c4=C4),
        out_shape=jax.ShapeDtypeStruct((C4, m_pad), jnp.bfloat16),
        grid=(nt,),
        in_specs=[pl.BlockSpec((K, tm), lambda i: (0, i)),
                  pl.BlockSpec((2 * C4, K), lambda i: (0, 0)),
                  pl.BlockSpec((C4, 1), lambda i: (0, 0))],
        out_specs=pl.BlockSpec((C4, tm), lambda i: (0, i)),
        compiler_params=cparams,
    )(PT, w_stack2, shift4)

    # ---- pixel-shuffle the 4 parity classes back into (N, Cout, 2H+1, 2W+1), cast f32 at the end ----
    # TODO(synk): the parity->NCHW interleave stays in XLA (strided 2x2 scatter is not a lane-dense BlockSpec).
    y = ybig[:, :M2].reshape(2, 2, Cout, N, Hp, Wp)             # (ph, pw, co, n, a, b)
    y = jnp.transpose(y, (3, 2, 4, 0, 5, 1)).reshape(N, Cout, 2 * Hp, 2 * Wp)
    return y[:, :, :OH, :OW].astype(jnp.float32)


def _reference(x_nchw, w_pt, bias, gamma, beta):
    """Pure-JAX reference (independent path via lax.conv_general_dilated)."""
    w_oihw = jnp.transpose(w_pt, (1, 0, 2, 3))[:, :, ::-1, ::-1]   # flip spatially
    y = jax.lax.conv_general_dilated(
        x_nchw, w_oihw,
        window_strides=(1, 1),
        padding=((2, 2), (2, 2)),
        lhs_dilation=(2, 2),
        dimension_numbers=("NCHW", "OIHW", "NCHW"),
        precision=jax.lax.Precision.HIGHEST,
    )
    y = y + bias[None, :, None, None]
    mean = jnp.mean(y, axis=(0, 2, 3), keepdims=True)
    var = jnp.mean((y - mean) ** 2, axis=(0, 2, 3), keepdims=True)  # biased
    yn = (y - mean) * jax.lax.rsqrt(var + EPS)
    yn = yn * gamma[None, :, None, None] + beta[None, :, None, None]
    return jnp.maximum(yn, 0.0)


if __name__ == "__main__":
    # small shapes consistent with the module: batch=2, in_ch=4, H=W=16, out_ch=8
    N, Cin, H, W = 2, 4, 16, 16
    Cout = 8

    key = jax.random.PRNGKey(0)
    kx, kw, kb, kg, kbe = jax.random.split(key, 5)
    x = jax.random.normal(kx, (N, Cin, H, W), dtype=jnp.float32)
    # ConvTranspose2d weight layout: (in_ch, out_ch, kH, kW); deterministic synthetic init
    w = 0.2 * jax.random.normal(kw, (Cin, Cout, 3, 3), dtype=jnp.float32)
    b = 0.1 * jax.random.normal(kb, (Cout,), dtype=jnp.float32)
    gamma = 1.0 + 0.1 * jax.random.normal(kg, (Cout,), dtype=jnp.float32)
    beta = 0.1 * jax.random.normal(kbe, (Cout,), dtype=jnp.float32)

    fwd = jax.jit(conv_trans_uint_to_odd_forward)
    out = jax.block_until_ready(fwd(x, w, b, gamma, beta))
    assert out.shape == (N, Cout, 2 * H + 1, 2 * W + 1), out.shape

    ref = jax.block_until_ready(_reference(x, w, b, gamma, beta))
    diff = jnp.abs(out - ref)
    # 2e-2 guardrail for the math path + one bf16 ulp for the (intentional) bf16 output store.
    tol = 2e-2 + jnp.abs(ref) * (2.0 ** -7)
    max_err = float(jnp.max(diff))
    assert bool(jnp.all(diff <= tol)), f"max abs error too large: {max_err}"

    print("KERNEL_OK")
</pallas_src>

<mosaic_0001>
module attributes {stable_mosaic.version = 11 : i64} {
  func.func @_stats_kernel(%arg0: i32, %arg1: memref<16x128xbf16, #tpu.memory_space<vmem>>, %arg2: memref<64x16xbf16, #tpu.memory_space<vmem>>, %arg3: memref<1x128xi32, #tpu.memory_space<vmem>>, %arg4: memref<1x16x1xf32, #tpu.memory_space<vmem>>) attributes {dimension_semantics = [#tpu.dimension_semantics<parallel>], iteration_bounds = array<i64: 5>, scalar_prefetch = 0 : i64, scratch_operands = 0 : i64, tpu.core_type = #tpu.core_type<tc>, window_params = [{transform_indices = @transform_0, window_bounds = array<i64: 16, 128>}, {pipeline_mode = #tpu.pipeline_mode<synchronous>, transform_indices = @transform_1, window_bounds = array<i64: 64, 16>}, {transform_indices = @transform_2, window_bounds = array<i64: 1, 128>}, {transform_indices = @transform_3, window_bounds = array<i64: 1, 16, 1>}]} {
    %c0 = arith.constant 0 : index
    %c0_0 = arith.constant 0 : index
    %0 = vector.load %arg1[%c0, %c0_0] : memref<16x128xbf16, #tpu.memory_space<vmem>>, vector<16x128xbf16>
    %c0_1 = arith.constant 0 : index
    %c0_2 = arith.constant 0 : index
    %1 = vector.load %arg2[%c0_1, %c0_2] : memref<64x16xbf16, #tpu.memory_space<vmem>>, vector<64x16xbf16>
    %cst = arith.constant dense<0.000000e+00> : vector<64x128xf32>
    %2 = tpu.matmul %1, %0, %cst {dimension_numbers = #tpu.dot_dimension_numbers<[1], [0], [0], [1], [0, 0, 1, 1], [], []>} : vector<64x16xbf16>, vector<16x128xbf16>, vector<64x128xf32> -> vector<64x128xf32>
    %3 = vector.extract_strided_slice %2 {offsets = [0, 0], sizes = [32, 128], strides = [1, 1]} : vector<64x128xf32> to vector<32x128xf32>
    %4 = vector.extract_strided_slice %2 {offsets = [32, 0], sizes = [32, 128], strides = [1, 1]} : vector<64x128xf32> to vector<32x128xf32>
    %5 = arith.addf %3, %4 : vector<32x128xf32>
    %c0_3 = arith.constant 0 : index
    %c0_4 = arith.constant 0 : index
    %6 = vector.load %arg3[%c0_3, %c0_4] : memref<1x128xi32, #tpu.memory_space<vmem>>, vector<1x128xi32>
    %c0_i32 = arith.constant 0 : i32
    %7 = vector.broadcast %c0_i32 : i32 to vector<1x128xi32>
    %8 = arith.cmpi sge, %6, %7 : vector<1x128xi32>
    %c1_i32 = arith.constant 1 : i32
    %9 = vector.broadcast %c1_i32 : i32 to vector<1x128xi32>
    %10 = arith.cmpi eq, %6, %9 : vector<1x128xi32>
    %c3_i32 = arith.constant 3 : i32
    %11 = vector.broadcast %c3_i32 : i32 to vector<1x128xi32>
    %12 = arith.cmpi eq, %6, %11 : vector<1x128xi32>
    %13 = arith.ori %10, %12 : vector<1x128xi1>
    %c2_i32 = arith.constant 2 : i32
    %14 = vector.broadcast %c2_i32 : i32 to vector<1x128xi32>
    %15 = arith.cmpi sge, %6, %14 : vector<1x128xi32>
    %c3_i32_5 = arith.constant 3 : i32
    %16 = vector.broadcast %c3_i32_5 : i32 to vector<1x128xi32>
    %17 = arith.cmpi eq, %6, %16 : vector<1x128xi32>
    %18 = arith.mulf %5, %5 : vector<32x128xf32>
    %19 = vector.extract_strided_slice %5 {offsets = [0, 0], sizes = [8, 128], strides = [1, 1]} : vector<32x128xf32> to vector<8x128xf32>
    %cst_6 = arith.constant 0.000000e+00 : f32
    %20 = vector.shape_cast %8 : vector<1x128xi1> to vector<1x128xi1>
    %21 = vector.broadcast %20 : vector<1x128xi1> to vector<8x128xi1>
    %22 = vector.broadcast %cst_6 : f32 to vector<8x128xf32>
    %23 = arith.select %21, %19, %22 : vector<8x128xi1>, vector<8x128xf32>
    %24 = vector.extract_strided_slice %5 {offsets = [8, 0], sizes = [8, 128], strides = [1, 1]} : vector<32x128xf32> to vector<8x128xf32>
    %cst_7 = arith.constant 0.000000e+00 : f32
    %25 = vector.shape_cast %13 : vector<1x128xi1> to vector<1x128xi1>
    %26 = vector.broadcast %25 : vector<1x128xi1> to vector<8x128xi1>
    %27 = vector.broadcast %cst_7 : f32 to vector<8x128xf32>
    %28 = arith.select %26, %24, %27 : vector<8x128xi1>, vector<8x128xf32>
    %29 = arith.addf %23, %28 : vector<8x128xf32>
    %30 = vector.extract_strided_slice %5 {offsets = [16, 0], sizes = [8, 128], strides = [1, 1]} : vector<32x128xf32> to vector<8x128xf32>
    %cst_8 = arith.constant 0.000000e+00 : f32
    %31 = vector.shape_cast %15 : vector<1x128xi1> to vector<1x128xi1>
    %32 = vector.broadcast %31 : vector<1x128xi1> to vector<8x128xi1>
    %33 = vector.broadcast %cst_8 : f32 to vector<8x128xf32>
    %34 = arith.select %32, %30, %33 : vector<8x128xi1>, vector<8x128xf32>
    %35 = arith.addf %29, %34 : vector<8x128xf32>
    %36 = vector.extract_strided_slice %5 {offsets = [24, 0], sizes = [8, 128], strides = [1, 1]} : vector<32x128xf32> to vector<8x128xf32>
    %cst_9 = arith.constant 0.000000e+00 : f32
    %37 = vector.shape_cast %17 : vector<1x128xi1> to vector<1x128xi1>
    %38 = vector.broadcast %37 : vector<1x128xi1> to vector<8x128xi1>
    %39 = vector.broadcast %cst_9 : f32 to vector<8x128xf32>
    %40 = arith.select %38, %36, %39 : vector<8x128xi1>, vector<8x128xf32>
    %41 = arith.addf %35, %40 : vector<8x128xf32>
    %42 = vector.extract_strided_slice %18 {offsets = [0, 0], sizes = [8, 128], strides = [1, 1]} : vector<32x128xf32> to vector<8x128xf32>
    %cst_10 = arith.constant 0.000000e+00 : f32
    %43 = vector.shape_cast %8 : vector<1x128xi1> to vector<1x128xi1>
    %44 = vector.broadcast %43 : vector<1x128xi1> to vector<8x128xi1>
    %45 = vector.broadcast %cst_10 : f32 to vector<8x128xf32>
    %46 = arith.select %44, %42, %45 : vector<8x128xi1>, vector<8x128xf32>
    %47 = vector.extract_strided_slice %18 {offsets = [8, 0], sizes = [8, 128], strides = [1, 1]} : vector<32x128xf32> to vector<8x128xf32>
    %cst_11 = arith.constant 0.000000e+00 : f32
    %48 = vector.shape_cast %13 : vector<1x128xi1> to vector<1x128xi1>
    %49 = vector.broadcast %48 : vector<1x128xi1> to vector<8x128xi1>
    %50 = vector.broadcast %cst_11 : f32 to vector<8x128xf32>
    %51 = arith.select %49, %47, %50 : vector<8x128xi1>, vector<8x128xf32>
    %52 = arith.addf %46, %51 : vector<8x128xf32>
    %53 = vector.extract_strided_slice %18 {offsets = [16, 0], sizes = [8, 128], strides = [1, 1]} : vector<32x128xf32> to vector<8x128xf32>
    %cst_12 = arith.constant 0.000000e+00 : f32
    %54 = vector.shape_cast %15 : vector<1x128xi1> to vector<1x128xi1>
    %55 = vector.broadcast %54 : vector<1x128xi1> to vector<8x128xi1>
    %56 = vector.broadcast %cst_12 : f32 to vector<8x128xf32>
    %57 = arith.select %55, %53, %56 : vector<8x128xi1>, vector<8x128xf32>
    %58 = arith.addf %52, %57 : vector<8x128xf32>
    %59 = vector.extract_strided_slice %18 {offsets = [24, 0], sizes = [8, 128], strides = [1, 1]} : vector<32x128xf32> to vector<8x128xf32>
    %cst_13 = arith.constant 0.000000e+00 : f32
    %60 = vector.shape_cast %17 : vector<1x128xi1> to vector<1x128xi1>
    %61 = vector.broadcast %60 : vector<1x128xi1> to vector<8x128xi1>
    %62 = vector.broadcast %cst_13 : f32 to vector<8x128xf32>
    %63 = arith.select %61, %59, %62 : vector<8x128xi1>, vector<8x128xf32>
    %64 = arith.addf %58, %63 : vector<8x128xf32>
    %cst_14 = arith.constant dense<0.000000e+00> : vector<8xf32>
    %65 = vector.multi_reduction <add>, %41, %cst_14 [1] : vector<8x128xf32> to vector<8xf32>
    %66 = vector.shape_cast %65 : vector<8xf32> to vector<8x1xf32>
    %c0_15 = arith.constant 0 : index
    %c0_16 = arith.constant 0 : index
    %c0_17 = arith.constant 0 : index
    %67 = vector.load %arg4[%c0_15, %c0_16, %c0_17] : memref<1x16x1xf32, #tpu.memory_space<vmem>>, vector<1x8x1xf32>
    %68 = vector.shape_cast %67 : vector<1x8x1xf32> to vector<8x1xf32>
    %69 = vector.shape_cast %66 : vector<8x1xf32> to vector<1x8x1xf32>
    tpu.vector_store %arg4[%c0_15, %c0_16, %c0_17], %69 {strides = array<i32>} : memref<1x16x1xf32, #tpu.memory_space<vmem>>, vector<1x8x1xf32>,
    %cst_18 = arith.constant dense<0.000000e+00> : vector<8xf32>
    %70 = vector.multi_reduction <add>, %64, %cst_18 [1] : vector<8x128xf32> to vector<8xf32>
    %71 = vector.shape_cast %70 : vector<8xf32> to vector<8x1xf32>
    %c0_19 = arith.constant 0 : index
    %c8 = arith.constant 8 : index
    %c0_20 = arith.constant 0 : index
    %72 = vector.load %arg4[%c0_19, %c8, %c0_20] : memref<1x16x1xf32, #tpu.memory_space<vmem>>, vector<1x8x1xf32>
    %73 = vector.shape_cast %72 : vector<1x8x1xf32> to vector<8x1xf32>
    %74 = vector.shape_cast %71 : vector<8x1xf32> to vector<1x8x1xf32>
    tpu.vector_store %arg4[%c0_19, %c8, %c0_20], %74 {strides = array<i32>} : memref<1x16x1xf32, #tpu.memory_space<vmem>>, vector<1x8x1xf32>,
    return
  }
  func.func @transform_0(%arg0: i32) -> (i32, i32) {
    %c0_i32 = arith.constant 0 : i32
    %c0_i32_0 = arith.constant 0 : i32
    return %c0_i32, %arg0 : i32, i32
  }
  func.func @transform_1(%arg0: i32) -> (i32, i32) {
    %c0_i32 = arith.constant 0 : i32
    %c0_i32_0 = arith.constant 0 : i32
    %c0_i32_1 = arith.constant 0 : i32
    return %c0_i32, %c0_i32_0 : i32, i32
  }
  func.func @transform_2(%arg0: i32) -> (i32, i32) {
    %c0_i32 = arith.constant 0 : i32
    %c0_i32_0 = arith.constant 0 : i32
    return %c0_i32, %arg0 : i32, i32
  }
  func.func @transform_3(%arg0: i32) -> (i32, i32, i32) {
    %c0_i32 = arith.constant 0 : i32
    %c0_i32_0 = arith.constant 0 : i32
    %c0_i32_1 = arith.constant 0 : i32
    return %arg0, %c0_i32, %c0_i32_0 : i32, i32, i32
  }
}

module attributes {stable_mosaic.version = 11 : i64} {
  func.func @_norm_kernel(%arg0: i32, %arg1: memref<16x128xbf16, #tpu.memory_space<vmem>>, %arg2: memref<64x16xbf16, #tpu.memory_space<vmem>>, %arg3: memref<32x1xf32, #tpu.memory_space<vmem>>, %arg4: memref<32x128xbf16, #tpu.memory_space<vmem>>) attributes {dimension_semantics = [#tpu.dimension_semantics<parallel>], iteration_bounds = array<i64: 5>, scalar_prefetch = 0 : i64, scratch_operands = 0 : i64, tpu.core_type = #tpu.core_type<tc>, window_params = [{transform_indices = @transform_0, window_bounds = array<i64: 16, 128>}, {pipeline_mode = #tpu.pipeline_mode<synchronous>, transform_indices = @transform_1, window_bounds = array<i64: 64, 16>}, {pipeline_mode = #tpu.pipeline_mode<synchronous>, transform_indices = @transform_2, window_bounds = array<i64: 32, 1>}, {transform_indices = @transform_3, window_bounds = array<i64: 32, 128>}]} {
    %c0 = arith.constant 0 : index
    %c0_0 = arith.constant 0 : index
    %0 = vector.load %arg2[%c0, %c0_0] : memref<64x16xbf16, #tpu.memory_space<vmem>>, vector<64x16xbf16>
    %c0_1 = arith.constant 0 : index
    %c0_2 = arith.constant 0 : index
    %1 = vector.load %arg1[%c0_1, %c0_2] : memref<16x128xbf16, #tpu.memory_space<vmem>>, vector<16x128xbf16>
    %cst = arith.constant dense<0.000000e+00> : vector<64x128xf32>
    %2 = tpu.matmul %0, %1, %cst {dimension_numbers = #tpu.dot_dimension_numbers<[1], [0], [0], [1], [0, 0, 1, 1], [], []>} : vector<64x16xbf16>, vector<16x128xbf16>, vector<64x128xf32> -> vector<64x128xf32>
    %3 = vector.extract_strided_slice %2 {offsets = [0, 0], sizes = [32, 128], strides = [1, 1]} : vector<64x128xf32> to vector<32x128xf32>
    %4 = vector.extract_strided_slice %2 {offsets = [32, 0], sizes = [32, 128], strides = [1, 1]} : vector<64x128xf32> to vector<32x128xf32>
    %5 = arith.addf %3, %4 : vector<32x128xf32>
    %c0_3 = arith.constant 0 : index
    %c0_4 = arith.constant 0 : index
    %6 = vector.load %arg3[%c0_3, %c0_4] : memref<32x1xf32, #tpu.memory_space<vmem>>, vector<32x1xf32>
    %7 = vector.broadcast %6 : vector<32x1xf32> to vector<32x128xf32>
    %8 = arith.addf %5, %7 : vector<32x128xf32>
    %cst_5 = arith.constant 0.000000e+00 : f32
    %9 = vector.broadcast %cst_5 : f32 to vector<32x128xf32>
    %10 = arith.maximumf %8, %9 : vector<32x128xf32>
    %11 = arith.truncf %10 : vector<32x128xf32> to vector<32x128xbf16>
    %c0_6 = arith.constant 0 : index
    %c0_7 = arith.constant 0 : index
    %12 = vector.load %arg4[%c0_6, %c0_7] : memref<32x128xbf16, #tpu.memory_space<vmem>>, vector<32x128xbf16>
    tpu.vector_store %arg4[%c0_6, %c0_7], %11 {strides = array<i32>} : memref<32x128xbf16, #tpu.memory_space<vmem>>, vector<32x128xbf16>,
    return
  }
  func.func @transform_0(%arg0: i32) -> (i32, i32) {
    %c0_i32 = arith.constant 0 : i32
    %c0_i32_0 = arith.constant 0 : i32
    return %c0_i32, %arg0 : i32, i32
  }
  func.func @transform_1(%arg0: i32) -> (i32, i32) {
    %c0_i32 = arith.constant 0 : i32
    %c0_i32_0 = arith.constant 0 : i32
    %c0_i32_1 = arith.constant 0 : i32
    return %c0_i32, %c0_i32_0 : i32, i32
  }
  func.func @transform_2(%arg0: i32) -> (i32, i32) {
    %c0_i32 = arith.constant 0 : i32
    %c0_i32_0 = arith.constant 0 : i32
    %c0_i32_1 = arith.constant 0 : i32
    return %c0_i32, %c0_i32_0 : i32, i32
  }
  func.func @transform_3(%arg0: i32) -> (i32, i32) {
    %c0_i32 = arith.constant 0 : i32
    %c0_i32_0 = arith.constant 0 : i32
    return %c0_i32, %arg0 : i32, i32
  }
}

</mosaic_0001>

<llo_original>
// kernel: tile.18
$region0: #{tile.18}
  #allocation0 [shape = 's32[1]{0}', space=sflag, size = 0x4, scoped, tag = 'scoped memory for tile.18']
  %s0 = inlined_call_operand.vmem [shape: f32[8], index: 0, kind: input, shape index: {}]
  %s1 = inlined_call_operand.vmem [shape: f32[4,8], index: 1, kind: output, shape index: {}]
  // Predicated region
  $region2: #{tile.18} parent=0 // pred_check
    _
  $region3: #{tile.18} parent=0 // pred_check_branch
    %3 = sbr.rel (0) target = $region5
  $region4: #{tile.18} parent=0 // pred_region
    _
  $region5: #{tile.18} parent=0 // pred_fallthru
    _
  %v4 = vld [vmem:[%s0] ss:$0 sm:$0xff]
  %5 = vst [vmem:[%s1] sm:$0xf] %v4

// kernel: mul.15
$region0: #{mul.15}
  %s0 = inlined_call_operand.vmem [shape: f32[4,8], index: 0, kind: input, shape index: {}]
  %s1 = inlined_call_operand.vmem [shape: f32[32], index: 1, kind: output, shape index: {}]
  $region1: #{mul.15} parent=0
    #allocation0 [shape = 'u8[4096]{0}', space=vmem, size = 0x1000, scoped, tag = 'scoped mem for output reshape']
    #allocation1 [shape = 'u8[4096]{0}', space=vmem, size = 0x1000, scoped, tag = 'scoped mem for input reshape']
    %s3 = sshllo.u32 0, 4
    %v4 = vld [vmem:[%s0] sm:%s3]
    %5 = vst [vmem:[#allocation1] sm:%s3] %v4
    %v6 = vld [vmem:[#allocation1] sm:$0x1]
    %vm7 = vcmask 64512
    %8 = vst.msk [vmem:[#allocation0] sm:$0x1] %vm7, %v6
    %s9 = scalar_lea.vmem [#allocation1], 3
    %v10 = vld [vmem:[%s9] sm:$0x1]
    %11 = vrot.lane.b32.xlu0 %v10, 24
    %v12 = vpop.permute.xlu0 %11
    %vm13 = vcmask 261312
    %14 = vst.msk [vmem:[#allocation0] sm:$0x1] %vm13, %v12
    %s15 = scalar_lea.vmem [#allocation1], 2
    %v16 = vld [vmem:[%s15] sm:$0x1]
    %17 = vrot.lane.b32.xlu0 %v16, 16
    %v18 = vpop.permute.xlu0 %17
    %vm19 = vcmask 195712
    %20 = vst.msk [vmem:[#allocation0] sm:$0x1] %vm19, %v18
    %s21 = scalar_lea.vmem [#allocation1], 1
    %v22 = vld [vmem:[%s21] sm:$0x1]
    %23 = vrot.lane.b32.xlu0 %v22, 8
    %v24 = vpop.permute.xlu0 %23
    %vm25 = vcmask 130112
    %26 = vst.msk [vmem:[#allocation0] sm:$0x1] %vm25, %v24
    %s28 = sshllo.u32 0, 1
    %v30 = vld [vmem:[#allocation0] sm:%s28]
    %s31 = sshllo.u32 0, 1
    %32 = vst [vmem:[%s1] sm:%s31] %v30

// kernel: tile.0
$region0: #{tile.0}
  %s0 = inlined_call_operand.vmem [shape: f32[4,8], index: 0, kind: input, shape index: {}]
  %s1 = inlined_call_operand.vmem [shape: f32[32,1], index: 1, kind: output, shape index: {}]
  $region1: #{tile.0} parent=0
    #allocation0 [shape = 'u8[4096]{0}', space=vmem, size = 0x1000, scoped, tag = 'scoped mem for input reshape']
    %s3 = sshllo.u32 0, 4
    %v4 = vld [vmem:[%s0] sm:%s3]
    %5 = vst [vmem:[#allocation0] sm:%s3] %v4
    %v6 = vld [vmem:[#allocation0] sm:$0xf]
    %vm7 = vcmask 7168
    %8 = vst.msk [vmem:[%s1] ss:$8 sm:$0xf] %vm7, %v6
    %v9 = vld [vmem:[#allocation0] sm:$0xf]
    %10 = vrot.lane.b32.xlu0 %v9, 127
    %v11 = vpop.permute.xlu0 %10
    %vm12 = vcmask 7168
    %s13 = scalar_lea.vmem %s1, 1
    %14 = vst.msk [vmem:[%s13] ss:$8 sm:$0xf] %vm12, %v11
    %v15 = vld [vmem:[#allocation0] sm:$0xf]
    %16 = vrot.lane.b32.xlu0 %v15, 126
    %v17 = vpop.permute.xlu0 %16
    %vm18 = vcmask 7168
    %s19 = scalar_lea.vmem %s1, 2
    %20 = vst.msk [vmem:[%s19] ss:$8 sm:$0xf] %vm18, %v17
    %v21 = vld [vmem:[#allocation0] sm:$0xf]
    %22 = vrot.lane.b32.xlu0 %v21, 125
    %v23 = vpop.permute.xlu0 %22
    %vm24 = vcmask 7168
    %s25 = scalar_lea.vmem %s1, 3
    %26 = vst.msk [vmem:[%s25] ss:$8 sm:$0xf] %vm24, %v23
    %v27 = vld [vmem:[#allocation0] sm:$0xf]
    %28 = vrot.lane.b32.xlu0 %v27, 124
    %v29 = vpop.permute.xlu0 %28
    %vm30 = vcmask 7168
    %s31 = scalar_lea.vmem %s1, 4
    %32 = vst.msk [vmem:[%s31] ss:$8 sm:$0xf] %vm30, %v29
    %v33 = vld [vmem:[#allocation0] sm:$0xf]
    %34 = vrot.lane.b32.xlu0 %v33, 123
    %v35 = vpop.permute.xlu0 %34
    %vm36 = vcmask 7168
    %s37 = scalar_lea.vmem %s1, 5
    %38 = vst.msk [vmem:[%s37] ss:$8 sm:$0xf] %vm36, %v35
    %v39 = vld [vmem:[#allocation0] sm:$0xf]
    %40 = vrot.lane.b32.xlu0 %v39, 122
    %v41 = vpop.permute.xlu0 %40
    %vm42 = vcmask 7168
    %s43 = scalar_lea.vmem %s1, 6
    %44 = vst.msk [vmem:[%s43] ss:$8 sm:$0xf] %vm42, %v41
    %v45 = vld [vmem:[#allocation0] sm:$0xf]
    %46 = vrot.lane.b32.xlu0 %v45, 121
    %v47 = vpop.permute.xlu0 %46
    %vm48 = vcmask 7168
    %s49 = scalar_lea.vmem %s1, 7
    %50 = vst.msk [vmem:[%s49] ss:$8 sm:$0xf] %vm48, %v47

// kernel: conv_trans_uint_to_odd_forward.2
$region0: #{conv_trans_uint_to_odd_forward.2}
  #allocation0 [shape = 'u32[]', space=smem, size = 0x4, offset = 0x4, fixed_abs, tag = 'smem constant byte address 0x4 - core index']
  #allocation1 [shape = 'u32[144,128]{1,0:T(1,128)}', space=vmem, size = 0x12000, scoped, tag = 'internal scratch']
  %s0 = inlined_call_operand.vmem [shape: bf16[16,640], index: 0, kind: input, shape index: {}]
  %s1 = inlined_call_operand.vmem [shape: bf16[64,16], index: 1, kind: input, shape index: {}]
  %s2 = inlined_call_operand.vmem [shape: s32[1,640], index: 2, kind: input, shape index: {}]
  %s3 = inlined_call_operand.vmem [shape: f32[5,16,1], index: 3, kind: output, shape index: {}]
  %s4 = sld [smem:[#allocation0]]
  $region86: #{conv_trans_uint_to_odd_forward.2} parent=0
    _
  %s6 = ssub.s32 1, %s4
  %s7 = scalar_select 0, %s6, %s4
  $region1: #{conv_trans_uint_to_odd_forward.2} parent=0
    #allocation2 [shape = 'u8[8192]{0}', space=vmem, size = 0x2000, scoped, tag = 'input window, operand 0']
    loop: start=0, step=1, limit=7
    $region2: #{conv_trans_uint_to_odd_forward.2} parent=1 // loop_pre_header
      _
    $region3: #{conv_trans_uint_to_odd_forward.2} parent=1 // loop_header
      %s9 = sphi 0, %s13
      %p10 = scmp.ge.s32.totalorder %s9, 7
      %s19 = sphi 0, %s21
      %s22 = sphi 0, %s19
      %s23 = sphi 0, %s22
      %s39 = sphi 0, %s23
      %s43 = sphi 0, %s43
      %s45 = sphi 0, %s43
      %s46 = sphi 0, %s45
      %s60 = sphi 0, %s46
      %s66 = sphi 0, %s68
      %s69 = sphi 0, %s66
      %s70 = sphi 0, %s69
      %s86 = sphi 0, %s70
      %s92 = sphi 0, %s94
      %s95 = sphi 0, %s92
      %s96 = sphi 0, %s95
      %s112 = sphi 0, %s96
    $region4: #{conv_trans_uint_to_odd_forward.2} parent=1 // loop_header_branch
      %12 = sbr.rel (%p10) target = $region8
    $region5: #{conv_trans_uint_to_odd_forward.2} parent=1 // loop_body
      %s14 = ssub.s32 %s9, 1
      %s15 = ssub.s32 %s9, 2
      %s16 = sadd.s32 %s9, 1
      %s17 = ssub.s32 %s9, %s16
      %p18 = scmp.eq.s32.totalorder %s17, 0
      %s20 = sadd.s32 %s19, 1
      %s21 = scalar_select %p18, %s19, %s20
      %p24 = pneg %p18
      %p25 = scmp.eq.s32.totalorder %s9, 4
      %p26 = por %p24, %p25
      %p27 = scmp.ne.s32.totalorder %s19, %s22
      %p28 = scmp.eq.s32.totalorder %s9, 0
      %p29 = por %p27, %p28
      %p30 = scmp.ne.s32.totalorder %s19, %s22
      %p31 = scmp.eq.s32.totalorder %s14, 4
      %p32 = por %p30, %p31
      %p33 = scmp.ne.s32.totalorder %s22, %s23
      %p34 = scmp.eq.s32.totalorder %s14, 0
      %p35 = por %p33, %p34
      %p36 = scmp.ne.s32.totalorder %s22, %s23
      %p37 = scmp.eq.s32.totalorder %s15, 4
      %p38 = por %p36, %p37
      %p40 = scmp.ne.s32.totalorder %s23, %s39
      %p41 = scmp.eq.s32.totalorder %s15, 0
      %p42 = por %p40, %p41
      %s44 = sadd.s32 %s43, 1
      %p47 = scmp.eq.s32.totalorder %s9, 4
      %p48 = scmp.ne.s32.totalorder %s43, %s45
      %p49 = scmp.eq.s32.totalorder %s9, 0
      %p50 = por %p48, %p49
      %p51 = scmp.ne.s32.totalorder %s43, %s45
      %p52 = scmp.eq.s32.totalorder %s14, 4
      %p53 = por %p51, %p52
      %p54 = scmp.ne.s32.totalorder %s45, %s46
      %p55 = scmp.eq.s32.totalorder %s14, 0
      %p56 = por %p54, %p55
      %p57 = scmp.ne.s32.totalorder %s45, %s46
      %p58 = scmp.eq.s32.totalorder %s15, 4
      %p59 = por %p57, %p58
      %p61 = scmp.ne.s32.totalorder %s46, %s60
      %p62 = scmp.eq.s32.totalorder %s15, 0
      %p63 = por %p61, %p62
      %s64 = ssub.s32 %s9, %s16
      %p65 = scmp.eq.s32.totalorder %s64, 0
      %s67 = sadd.s32 %s66, 1
      %s68 = scalar_select %p65, %s66, %s67
      %p71 = pneg %p65
      %p72 = scmp.eq.s32.totalorder %s9, 4
      %p73 = por %p71, %p72
      %p74 = scmp.ne.s32.totalorder %s66, %s69
      %p75 = scmp.eq.s32.totalorder %s9, 0
      %p76 = por %p74, %p75
      %p77 = scmp.ne.s32.totalorder %s66, %s69
      %p78 = scmp.eq.s32.totalorder %s14, 4
      %p79 = por %p77, %p78
      %p80 = scmp.ne.s32.totalorder %s69, %s70
      %p81 = scmp.eq.s32.totalorder %s14, 0
      %p82 = por %p80, %p81
      %p83 = scmp.ne.s32.totalorder %s69, %s70
      %p84 = scmp.eq.s32.totalorder %s15, 4
      %p85 = por %p83, %p84
      %p87 = scmp.ne.s32.totalorder %s70, %s86
      %p88 = scmp.eq.s32.totalorder %s15, 0
      %p89 = por %p87, %p88
      %s90 = ssub.s32 %s9, %s16
      %p91 = scmp.eq.s32.totalorder %s90, 0
      %s93 = sadd.s32 %s92, 1
      %s94 = scalar_select %p91, %s92, %s93
      %p97 = pneg %p91
      %p98 = scmp.eq.s32.totalorder %s9, 4
      %p99 = por %p97, %p98
      %p100 = scmp.ne.s32.totalorder %s92, %s95
      %p101 = scmp.eq.s32.totalorder %s9, 0
      %p102 = por %p100, %p101
      %p103 = scmp.ne.s32.totalorder %s92, %s95
      %p104 = scmp.eq.s32.totalorder %s14, 4
      %p105 = por %p103, %p104
      %p106 = scmp.ne.s32.totalorder %s95, %s96
      %p107 = scmp.eq.s32.totalorder %s14, 0
      %p108 = por %p106, %p107
      %p109 = scmp.ne.s32.totalorder %s95, %s96
      %p110 = scmp.eq.s32.totalorder %s15, 4
      %p111 = por %p109, %p110
      %p113 = scmp.ne.s32.totalorder %s96, %s112
      %p114 = scmp.eq.s32.totalorder %s15, 0
      %p115 = por %p113, %p114
      %p116 = scmp.le.s32.totalorder 1, %s9
      %p117 = scmp.lt.s32.totalorder %s9, 6
      %p118 = pnand %p116, %p117
      %p119 = pneg %p118
      // Predicated region
      $region9: #{conv_trans_uint_to_odd_forward.2} parent=5 // pred_check
        _
      $region10: #{conv_trans_uint_to_odd_forward.2} parent=5 // pred_check_branch
        %121 = sbr.rel (%p118) target = $region12
      $region11: #{conv_trans_uint_to_odd_forward.2} parent=5 // pred_region
        %s122 = ssub.s32 %s9, 1
        // Predicated region
        $region13: #{conv_trans_uint_to_odd_forward.2} parent=11 // pred_check
          %p123 = pneg %p56
        $region14: #{conv_trans_uint_to_odd_forward.2} parent=11 // pred_check_branch
          %125 = sbr.rel (%p123) target = $region16
        $region15: #{conv_trans_uint_to_odd_forward.2} parent=11 // pred_region
          _
        $region16: #{conv_trans_uint_to_odd_forward.2} parent=11 // pred_fallthru
          _
      $region12: #{conv_trans_uint_to_odd_forward.2} parent=5 // pred_fallthru
        _
      %p126 = scmp.lt.s32.totalorder %s9, 5
      // Predicated region
      $region17: #{conv_trans_uint_to_odd_forward.2} parent=5 // pred_check
        %p127 = pneg %p126
      $region18: #{conv_trans_uint_to_odd_forward.2} parent=5 // pred_check_branch
        %129 = sbr.rel (%p127) target = $region20
      $region19: #{conv_trans_uint_to_odd_forward.2} parent=5 // pred_region
        // Predicated region
        $region21: #{conv_trans_uint_to_odd_forward.2} parent=19 // pred_check
          %p130 = pneg %p29
        $region22: #{conv_trans_uint_to_odd_forward.2} parent=19 // pred_check_branch
          %132 = sbr.rel (%p130) target = $region24
        $region23: #{conv_trans_uint_to_odd_forward.2} parent=19 // pred_region
          %s133 = sand.u32 %s19, 1
          %s134 = sand.u32 %s19, 1
          %s135 = smul.addr %s134, 8
          %s136 = scalar_lea.vmem [#allocation2], %s135
          %s137 = smul.addr %s9, 4
          %s138 = scalar_lea.vmem %s0, %s137
          // Predicated region
          $region25: #{conv_trans_uint_to_odd_forward.2} parent=23 // pred_check
            _
          $region26: #{conv_trans_uint_to_odd_forward.2} parent=23 // pred_check_branch
            %140 = sbr.rel (0) target = $region28
          $region27: #{conv_trans_uint_to_odd_forward.2} parent=23 // pred_region
            // Predicated region
            $region29: #{conv_trans_uint_to_odd_forward.2} parent=27 // pred_check
              _
            $region30: #{conv_trans_uint_to_odd_forward.2} parent=27 // pred_check_branch
              %142 = sbr.rel target = $region32
            $region31: #{conv_trans_uint_to_odd_forward.2} parent=27 // pred_region
              // Predicated region
              $region44: #{conv_trans_uint_to_odd_forward.2} parent=31 // pred_check
                _
              $region45: #{conv_trans_uint_to_odd_forward.2} parent=31 // pred_check_branch
                %159 = sbr.rel (0) target = $region47
              $region46: #{conv_trans_uint_to_odd_forward.2} parent=31 // pred_region
                loop: start=0, step=1, limit=1
                $region48: #{conv_trans_uint_to_odd_forward.2} parent=46 // loop_pre_header
                  _
                $region49: #{conv_trans_uint_to_odd_forward.2} parent=46 // loop_header
                  %s161 = sphi 0, %s165
                  %p162 = scmp.ge.s32.totalorder %s161, 1
                  %s166 = sphi %s138, %s138
                  %s167 = sphi %s136, %s136
                $region50: #{conv_trans_uint_to_odd_forward.2} parent=46 // loop_header_branch
                  %164 = sbr.rel (%p162) target = $region54
                $region51: #{conv_trans_uint_to_odd_forward.2} parent=46 // loop_body
                  _
                $region52: #{conv_trans_uint_to_odd_forward.2} parent=46 // loop_footer
                  %s165 = sadd.s32 1, %s161
                $region53: #{conv_trans_uint_to_odd_forward.2} parent=46 // loop_footer_branch
                  %160 = sbr.rel target = $region49
                $region54: #{conv_trans_uint_to_odd_forward.2} parent=46 // loop_exit
                  _
                loop: start=0, step=1, limit=1
                $region55: #{conv_trans_uint_to_odd_forward.2} parent=46 // loop_pre_header
                  _
                $region56: #{conv_trans_uint_to_odd_forward.2} parent=46 // loop_header
                  %s170 = sphi 0, %s174
                  %p171 = scmp.ge.s32.totalorder %s170, 1
                  %s175 = sphi %s138, %s138
                  %s176 = sphi %s136, %s136
                $region57: #{conv_trans_uint_to_odd_forward.2} parent=46 // loop_header_branch
                  %173 = sbr.rel (%p171) target = $region61
                $region58: #{conv_trans_uint_to_odd_forward.2} parent=46 // loop_body
                  %v177 = vld [vmem:[%s175] sm:$0xf]
                  %178 = vst [vmem:[%s176] sm:$0xf] %v177
                  %v179 = vld [vmem:[%s175 + $0x14] sm:$0xf]
                  %180 = vst [vmem:[%s176 + $0x4] sm:$0xf] %v179
                $region59: #{conv_trans_uint_to_odd_forward.2} parent=46 // loop_footer
                  %s174 = sadd.s32 1, %s170
                $region60: #{conv_trans_uint_to_odd_forward.2} parent=46 // loop_footer_branch
                  %169 = sbr.rel target = $region56
                $region61: #{conv_trans_uint_to_odd_forward.2} parent=46 // loop_exit
                  _
              $region47: #{conv_trans_uint_to_odd_forward.2} parent=31 // pred_fallthru
                _
            $region32: #{conv_trans_uint_to_odd_forward.2} parent=27 // pred_fallthru
              _
            // Predicated region
            $region33: #{conv_trans_uint_to_odd_forward.2} parent=27 // pred_check
              _
            $region34: #{conv_trans_uint_to_odd_forward.2} parent=27 // pred_check_branch
              %144 = sbr.rel (0) target = $region36
            $region35: #{conv_trans_uint_to_odd_forward.2} parent=27 // pred_region
              loop: start=0, step=1, limit=1
              $region37: #{conv_trans_uint_to_odd_forward.2} parent=35 // loop_pre_header
                _
              $region38: #{conv_trans_uint_to_odd_forward.2} parent=35 // loop_header
                %s147 = sphi 0, %s151
                %p148 = scmp.ge.s32.totalorder %s147, 1
                %s152 = sphi %s138, %s138
                %s153 = sphi %s136, %s136
              $region39: #{conv_trans_uint_to_odd_forward.2} parent=35 // loop_header_branch
                %150 = sbr.rel (%p148) target = $region43
              $region40: #{conv_trans_uint_to_odd_forward.2} parent=35 // loop_body
                %v154 = vld [vmem:[%s152] sm:$0xf]
                %155 = vst [vmem:[%s153] sm:$0xf] %v154
                %v156 = vld [vmem:[%s152 + $0x14] sm:$0xf]
                %157 = vst [vmem:[%s153 + $0x4] sm:$0xf] %v156
              $region41: #{conv_trans_uint_to_odd_forward.2} parent=35 // loop_footer
                %s151 = sadd.s32 1, %s147
              $region42: #{conv_trans_uint_to_odd_forward.2} parent=35 // loop_footer_branch
                %146 = sbr.rel target = $region38
              $region43: #{conv_trans_uint_to_odd_forward.2} parent=35 // loop_exit
                _
            $region36: #{conv_trans_uint_to_odd_forward.2} parent=27 // pred_fallthru
              _
          $region28: #{conv_trans_uint_to_odd_forward.2} parent=23 // pred_fallthru
            _
          %181 = vnop
        $region24: #{conv_trans_uint_to_odd_forward.2} parent=19 // pred_fallthru
          _
        // Predicated region
        $region62: #{conv_trans_uint_to_odd_forward.2} parent=19 // pred_check
          %p182 = pneg %p76
        $region63: #{conv_trans_uint_to_odd_forward.2} parent=19 // pred_check_branch
          %184 = sbr.rel (%p182) target = $region65
        $region64: #{conv_trans_uint_to_odd_forward.2} parent=19 // pred_region
          %p185 = scmp.lt.s32.totalorder %s9, 4
          %s186 = scalar_select %p185, %s9, 4
          %s187 = scalar_lea.vmem %s2, %s186
        $region65: #{conv_trans_uint_to_odd_forward.2} parent=19 // pred_fallthru
          _
      $region20: #{conv_trans_uint_to_odd_forward.2} parent=5 // pred_fallthru
        _
      %p188 = scmp.le.s32.totalorder 1, %s9
      %p189 = scmp.lt.s32.totalorder %s9, 6
      %p190 = pnand %p188, %p189
      %p191 = pneg %p190
      // Predicated region
      $region66: #{conv_trans_uint_to_odd_forward.2} parent=5 // pred_check
        _
      $region67: #{conv_trans_uint_to_odd_forward.2} parent=5 // pred_check_branch
        %193 = sbr.rel (%p190) target = $region69
      $region68: #{conv_trans_uint_to_odd_forward.2} parent=5 // pred_region
        %s194 = ssub.s32 %s9, 1
        %s195 = sand.u32 %s22, 1
        %s196 = sand.u32 %s22, 1
        %s197 = smul.addr %s196, 8
        %s198 = scalar_lea.vmem [#allocation2], %s197
        // Predicated region
        $region70: #{conv_trans_uint_to_odd_forward.2} parent=68 // pred_check
          %p199 = pneg %p35
        $region71: #{conv_trans_uint_to_odd_forward.2} parent=68 // pred_check_branch
          %201 = sbr.rel (%p199) target = $region73
        $region72: #{conv_trans_uint_to_odd_forward.2} parent=68 // pred_region
          _
        $region73: #{conv_trans_uint_to_odd_forward.2} parent=68 // pred_fallthru
          _
        %s202 = sand.u32 %s22, 1
        %s203 = sand.u32 %s22, 1
        %s204 = smul.addr %s203, 8
        %s205 = scalar_lea.vmem [#allocation2], %s204
        %p206 = pneg %p35
        %p207 = pneg %p32
        %p208 = pneg %p56
        %p209 = pneg %p53
        %p210 = scmp.lt.s32.totalorder %s14, 4
        %s211 = scalar_select %p210, %s14, 4
        %s212 = scalar_lea.vmem %s2, %s211
        %p213 = pneg %p82
        %p214 = pneg %p79
        %p215 = pneg %p108
        %p216 = pneg %p105
        %p217 = scmp.lt.s32.totalorder %s14, 4
        %s218 = scalar_select %p217, %s14, 4
        %s219 = smul.addr %s218, 2
        %s220 = smul.addr %s219, 8
        %s221 = scalar_lea.vmem %s3, %s220
        %p222 = scmp.lt.s32.totalorder %s14, 4
        %s223 = scalar_select %p222, %s14, 4
        %s224 = scalar_lea.vmem %s2, %s223
        %p225 = scmp.lt.s32.totalorder %s14, 4
        %s226 = scalar_select %p225, %s14, 4
        %s227 = smul.addr %s226, 2
        %s228 = smul.addr %s227, 8
        %s229 = scalar_lea.vmem %s3, %s228
        %v231 = vld [vmem:[%s198] sm:$0xf]
        %v232 = vld [vmem:[%s198 + $0x4] sm:$0xf]
        %v233 = vld [vmem:[%s1] sm:$0xf]
        %v234 = vld [vmem:[%s1 + $0x4] sm:$0xf]
        %v235 = vld [vmem:[%s1 + $0x8] sm:$0xf]
        %v236 = vld [vmem:[%s1 + $0xc] sm:$0xf]
        %v237 = vld [vmem:[%s1 + $0x10] sm:$0xf]
        %v238 = vld [vmem:[%s1 + $0x14] sm:$0xf]
        %v239 = vld [vmem:[%s1 + $0x18] sm:$0xf]
        %v240 = vld [vmem:[%s1 + $0x1c] sm:$0xf]
        %v249 = vunpack.c.l.b16 %v233
        %v250 = vunpack.c.l.b16 %v234
        %v251 = vunpack.c.l.b16 %v235
        %v252 = vunpack.c.l.b16 %v236
        %v253 = vunpack.c.l.b16 %v237
        %v254 = vunpack.c.l.b16 %v238
        %v255 = vunpack.c.l.b16 %v239
        %v256 = vunpack.c.l.b16 %v240
        %v257 = vpack.c.b16 %v250, %v249
        %v258 = vpack.c.b16 %v252, %v251
        %v259 = vpack.c.b16 %v254, %v253
        %v260 = vpack.c.b16 %v256, %v255
        %v263 = vunpack.c.l.b16 %v231
        %v264 = vunpack.c.l.b16 %v232
        %v265 = vpack.c.b16 %v264, %v263
        %vm267 = vcmask 130048
        %v269 = vsel %vm267, %v257, 0
        %v272 = vsel %vm267, %v258, 0
        %v275 = vsel %vm267, %v259, 0
        %v278 = vsel %vm267, %v260, 0
        %280 = vmatprep.subr.bf16.mxu0 0
        %281 = vmatpush1.bf16.msra.mxu0 %v265
        %282 = vmatprep.subr.bf16.mxu0 0
        %283 = vmatpush1.bf16.msra.mxu0 0
        %284 = vmatprep.subr.bf16.mxu0 0
        %285 = vmatpush1.bf16.msra.mxu0 0
        %286 = vmatprep.subr.bf16.mxu0 0
        %287 = vmatpush1.bf16.msra.mxu0 0
        %288 = vmatprep.subr.bf16.mxu0 0
        %289 = vmatpush1.bf16.msra.mxu0 0
        %290 = vmatprep.subr.bf16.mxu0 0
        %291 = vmatpush1.bf16.msra.mxu0 0
        %292 = vmatprep.subr.bf16.mxu0 0
        %293 = vmatpush1.bf16.msra.mxu0 0
        %294 = vmatprep.subr.bf16.mxu0 0
        %295 = vmatpush1.bf16.msra.mxu0 0
        %296 = vmatprep.subr.bf16.mxu0 0
        %297 = vmatpush1.bf16.msra.mxu0 0
        %298 = vmatprep.subr.bf16.mxu0 0
        %299 = vmatpush1.bf16.msra.mxu0 0
        %300 = vmatprep.subr.bf16.mxu0 0
        %301 = vmatpush1.bf16.msra.mxu0 0
        %302 = vmatprep.subr.bf16.mxu0 0
        %303 = vmatpush1.bf16.msra.mxu0 0
        %304 = vmatprep.subr.bf16.mxu0 0
        %305 = vmatpush1.bf16.msra.mxu0 0
        %306 = vmatprep.subr.bf16.mxu0 0
        %307 = vmatpush1.bf16.msra.mxu0 0
        %308 = vmatprep.subr.bf16.mxu0 0
        %309 = vmatpush1.bf16.msra.mxu0 0
        %310 = vmatprep.subr.bf16.mxu0 0
        %311 = vmatpush1.bf16.msra.mxu0 0
        %312 = vmatprep.mubr.bf16.mxu0 0
        %313 = vmatmul.mubr.bf16.gmra.mrb[0].mxu0 %v269
        %v314 = vpop.f32.mrb[0].mxu0
        %v315 = vadd.f32 0.0, %v314
        %v316 = vpop.f32.mrb[0].mxu0
        %v317 = vpop.f32.mrb[0].mxu0
        %v318 = vadd.f32 0.0, %v317
        %v319 = vpop.f32.mrb[0].mxu0
        %320 = vmatprep.mubr.bf16.mxu0 0
        %321 = vmatmul.mubr.bf16.gmra.mrb[0].mxu0 %v272
        %v322 = vpop.f32.mrb[0].mxu0
        %v323 = vadd.f32 0.0, %v322
        %v324 = vpop.f32.mrb[0].mxu0
        %v325 = vpop.f32.mrb[0].mxu0
        %v326 = vadd.f32 0.0, %v325
        %v327 = vpop.f32.mrb[0].mxu0
        %328 = vmatprep.mubr.bf16.mxu0 0
        %329 = vmatmul.mubr.bf16.gmra.mrb[0].mxu0 %v275
        %v330 = vpop.f32.mrb[0].mxu0
        %v331 = vadd.f32 0.0, %v330
        %v332 = vpop.f32.mrb[0].mxu0
        %v333 = vpop.f32.mrb[0].mxu0
        %v334 = vadd.f32 0.0, %v333
        %v335 = vpop.f32.mrb[0].mxu0
        %336 = vmatprep.mubr.bf16.mxu0 0
        %337 = vmatmul.mubr.bf16.gmra.mrb[0].mxu0 %v278
        %v338 = vpop.f32.mrb[0].mxu0
        %v339 = vadd.f32 0.0, %v338
        %v340 = vpop.f32.mrb[0].mxu0
        %v341 = vpop.f32.mrb[0].mxu0
        %v342 = vadd.f32 0.0, %v341
        %v343 = vpop.f32.mrb[0].mxu0
        %344 = vdwg.mxu0
        %v345 = vadd.f32 %v315, %v331
        %v346 = vadd.f32 %v318, %v334
        %v347 = vadd.f32 %v323, %v339
        %v348 = vadd.f32 %v326, %v342
        %v349 = vld [vmem:[%s224] sm:$0x1]
        %vm350 = vcmp.ge.s32.totalorder %v349, 0
        %vm351 = vcmp.eq.s32.totalorder %v349, 1
        %vm352 = vcmp.eq.s32.totalorder %v349, 3
        %vm353 = vmor %vm351, %vm352
        %vm354 = vcmp.ge.s32.totalorder %v349, 2
        %v355 = vmul.f32 %v345, %v345
        %v356 = vmul.f32 %v346, %v346
        %v357 = vmul.f32 %v347, %v347
        %v358 = vmul.f32 %v348, %v348
        %v359 = vsel %vm350, 1, 0
        %v360 = vlaneseq
        %v361 = vshrl.u32 %v360, 7
        %v362 = vsub.s32 0, %v361
        %v363 = vrot.slane %v359, %v362
        %vm364 = vcmp.eq.s32.totalorder %v363, 1
        %v365 = vsel %vm364, %v345, 0.0
        %v366 = vsel %vm353, 1, 0
        %v367 = vlaneseq
        %v368 = vshrl.u32 %v367, 7
        %v369 = vsub.s32 0, %v368
        %v370 = vrot.slane %v366, %v369
        %vm371 = vcmp.eq.s32.totalorder %v370, 1
        %v372 = vsel %vm371, %v346, 0.0
        %v373 = vadd.f32 %v365, %v372
        %v374 = vsel %vm354, 1, 0
        %v375 = vlaneseq
        %v376 = vshrl.u32 %v375, 7
        %v377 = vsub.s32 0, %v376
        %v378 = vrot.slane %v374, %v377
        %vm379 = vcmp.eq.s32.totalorder %v378, 1
        %v380 = vsel %vm379, %v347, 0.0
        %v381 = vadd.f32 %v373, %v380
        %v382 = vsel %vm352, 1, 0
        %v383 = vlaneseq
        %v384 = vshrl.u32 %v383, 7
        %v385 = vsub.s32 0, %v384
        %v386 = vrot.slane %v382, %v385
        %vm387 = vcmp.eq.s32.totalorder %v386, 1
        %v388 = vsel %vm387, %v348, 0.0
        %v389 = vadd.f32 %v381, %v388
        %v390 = vsel %vm364, %v355, 0.0
        %v391 = vsel %vm371, %v356, 0.0
        %v392 = vadd.f32 %v390, %v391
        %v393 = vsel %vm379, %v357, 0.0
        %v394 = vadd.f32 %v392, %v393
        %v395 = vsel %vm387, %v358, 0.0
        %v396 = vadd.f32 %v394, %v395
        %397 = vadd.xlane.f32.xlu0 %v389
        %v398 = vpop.xlane.xlu0 %397
        %vm399 = vcmask 7168
        %400 = vst.msk [vmem:[%s229] sm:$0xff] %vm399, %v398
        %401 = vadd.xlane.f32.xlu0 %v396
        %v402 = vpop.xlane.xlu0 %401
        %403 = vst.msk [vmem:[%s229 + $0x8] sm:$0xff] %vm399, %v402
        %p404 = scmp.lt.s32.totalorder %s14, 4
        %s405 = scalar_select %p404, %s14, 4
        %s406 = smul.addr %s405, 2
        %s407 = smul.addr %s406, 8
        %s408 = scalar_lea.vmem %s3, %s407
        // Predicated region
        $region74: #{conv_trans_uint_to_odd_forward.2} parent=68 // pred_check
          %p409 = pneg %p105
        $region75: #{conv_trans_uint_to_odd_forward.2} parent=68 // pred_check_branch
          %411 = sbr.rel (%p409) target = $region77
        $region76: #{conv_trans_uint_to_odd_forward.2} parent=68 // pred_region
          _
        $region77: #{conv_trans_uint_to_odd_forward.2} parent=68 // pred_fallthru
          _
      $region69: #{conv_trans_uint_to_odd_forward.2} parent=5 // pred_fallthru
        _
      %p412 = scmp.le.s32.totalorder 2, %s9
      // Predicated region
      $region78: #{conv_trans_uint_to_odd_forward.2} parent=5 // pred_check
        %p413 = pneg %p412
      $region79: #{conv_trans_uint_to_odd_forward.2} parent=5 // pred_check_branch
        %415 = sbr.rel (%p413) target = $region81
      $region80: #{conv_trans_uint_to_odd_forward.2} parent=5 // pred_region
        %s416 = ssub.s32 %s9, 2
        // Predicated region
        $region82: #{conv_trans_uint_to_odd_forward.2} parent=80 // pred_check
          %p417 = pneg %p111
        $region83: #{conv_trans_uint_to_odd_forward.2} parent=80 // pred_check_branch
          %419 = sbr.rel (%p417) target = $region85
        $region84: #{conv_trans_uint_to_odd_forward.2} parent=80 // pred_region
          %p420 = scmp.lt.s32.totalorder %s15, 4
          %s421 = scalar_select %p420, %s15, 4
          %s422 = smul.addr %s421, 2
          %s423 = smul.addr %s422, 8
          %s424 = scalar_lea.vmem %s3, %s423
        $region85: #{conv_trans_uint_to_odd_forward.2} parent=80 // pred_fallthru
          _
      $region81: #{conv_trans_uint_to_odd_forward.2} parent=5 // pred_fallthru
        _
    $region6: #{conv_trans_uint_to_odd_forward.2} parent=1 // loop_footer
      %s13 = sadd.s32 1, %s9
    $region7: #{conv_trans_uint_to_odd_forward.2} parent=1 // loop_footer_branch
      %8 = sbr.rel target = $region3
    $region8: #{conv_trans_uint_to_odd_forward.2} parent=1 // loop_exit
      _

// kernel: conv_trans_uint_to_odd_forward.3
$region0: #{conv_trans_uint_to_odd_forward.3}
  #allocation0 [shape = 'u32[]', space=smem, size = 0x4, offset = 0x4, fixed_abs, tag = 'smem constant byte address 0x4 - core index']
  #allocation1 [shape = 'u32[144,128]{1,0:T(1,128)}', space=vmem, size = 0x12000, scoped, tag = 'internal scratch']
  %s0 = inlined_call_operand.vmem [shape: bf16[16,640], index: 0, kind: input, shape index: {}]
  %s1 = inlined_call_operand.vmem [shape: bf16[64,16], index: 1, kind: input, shape index: {}]
  %s2 = inlined_call_operand.vmem [shape: f32[32,1], index: 2, kind: input, shape index: {}]
  %s3 = inlined_call_operand.vmem [shape: bf16[32,640], index: 3, kind: output, shape index: {}]
  %s4 = sld [smem:[#allocation0]]
  $region123: #{conv_trans_uint_to_odd_forward.3} parent=0
    _
  %s6 = ssub.s32 1, %s4
  %s7 = scalar_select 0, %s6, %s4
  $region1: #{conv_trans_uint_to_odd_forward.3} parent=0
    #allocation2 [shape = 'u8[8192]{0}', space=vmem, size = 0x2000, scoped, tag = 'input window, operand 0']
    #allocation3 [shape = 'u8[16384]{0}', space=vmem, size = 0x4000, scoped, tag = 'output window, operand 0']
    loop: start=0, step=1, limit=7
    $region2: #{conv_trans_uint_to_odd_forward.3} parent=1 // loop_pre_header
      _
    $region3: #{conv_trans_uint_to_odd_forward.3} parent=1 // loop_header
      %s9 = sphi 0, %s13
      %p10 = scmp.ge.s32.totalorder %s9, 7
      %s19 = sphi 0, %s21
      %s22 = sphi 0, %s19
      %s23 = sphi 0, %s22
      %s39 = sphi 0, %s23
      %s43 = sphi 0, %s43
      %s45 = sphi 0, %s43
      %s46 = sphi 0, %s45
      %s60 = sphi 0, %s46
      %s64 = sphi 0, %s64
      %s66 = sphi 0, %s64
      %s67 = sphi 0, %s66
      %s81 = sphi 0, %s67
      %s87 = sphi 0, %s89
      %s90 = sphi 0, %s87
      %s91 = sphi 0, %s90
      %s107 = sphi 0, %s91
    $region4: #{conv_trans_uint_to_odd_forward.3} parent=1 // loop_header_branch
      %12 = sbr.rel (%p10) target = $region8
    $region5: #{conv_trans_uint_to_odd_forward.3} parent=1 // loop_body
      %s14 = ssub.s32 %s9, 1
      %s15 = ssub.s32 %s9, 2
      %s16 = sadd.s32 %s9, 1
      %s17 = ssub.s32 %s9, %s16
      %p18 = scmp.eq.s32.totalorder %s17, 0
      %s20 = sadd.s32 %s19, 1
      %s21 = scalar_select %p18, %s19, %s20
      %p24 = pneg %p18
      %p25 = scmp.eq.s32.totalorder %s9, 4
      %p26 = por %p24, %p25
      %p27 = scmp.ne.s32.totalorder %s19, %s22
      %p28 = scmp.eq.s32.totalorder %s9, 0
      %p29 = por %p27, %p28
      %p30 = scmp.ne.s32.totalorder %s19, %s22
      %p31 = scmp.eq.s32.totalorder %s14, 4
      %p32 = por %p30, %p31
      %p33 = scmp.ne.s32.totalorder %s22, %s23
      %p34 = scmp.eq.s32.totalorder %s14, 0
      %p35 = por %p33, %p34
      %p36 = scmp.ne.s32.totalorder %s22, %s23
      %p37 = scmp.eq.s32.totalorder %s15, 4
      %p38 = por %p36, %p37
      %p40 = scmp.ne.s32.totalorder %s23, %s39
      %p41 = scmp.eq.s32.totalorder %s15, 0
      %p42 = por %p40, %p41
      %s44 = sadd.s32 %s43, 1
      %p47 = scmp.eq.s32.totalorder %s9, 4
      %p48 = scmp.ne.s32.totalorder %s43, %s45
      %p49 = scmp.eq.s32.totalorder %s9, 0
      %p50 = por %p48, %p49
      %p51 = scmp.ne.s32.totalorder %s43, %s45
      %p52 = scmp.eq.s32.totalorder %s14, 4
      %p53 = por %p51, %p52
      %p54 = scmp.ne.s32.totalorder %s45, %s46
      %p55 = scmp.eq.s32.totalorder %s14, 0
      %p56 = por %p54, %p55
      %p57 = scmp.ne.s32.totalorder %s45, %s46
      %p58 = scmp.eq.s32.totalorder %s15, 4
      %p59 = por %p57, %p58
      %p61 = scmp.ne.s32.totalorder %s46, %s60
      %p62 = scmp.eq.s32.totalorder %s15, 0
      %p63 = por %p61, %p62
      %s65 = sadd.s32 %s64, 1
      %p68 = scmp.eq.s32.totalorder %s9, 4
      %p69 = scmp.ne.s32.totalorder %s64, %s66
      %p70 = scmp.eq.s32.totalorder %s9, 0
      %p71 = por %p69, %p70
      %p72 = scmp.ne.s32.totalorder %s64, %s66
      %p73 = scmp.eq.s32.totalorder %s14, 4
      %p74 = por %p72, %p73
      %p75 = scmp.ne.s32.totalorder %s66, %s67
      %p76 = scmp.eq.s32.totalorder %s14, 0
      %p77 = por %p75, %p76
      %p78 = scmp.ne.s32.totalorder %s66, %s67
      %p79 = scmp.eq.s32.totalorder %s15, 4
      %p80 = por %p78, %p79
      %p82 = scmp.ne.s32.totalorder %s67, %s81
      %p83 = scmp.eq.s32.totalorder %s15, 0
      %p84 = por %p82, %p83
      %s85 = ssub.s32 %s9, %s16
      %p86 = scmp.eq.s32.totalorder %s85, 0
      %s88 = sadd.s32 %s87, 1
      %s89 = scalar_select %p86, %s87, %s88
      %p92 = pneg %p86
      %p93 = scmp.eq.s32.totalorder %s9, 4
      %p94 = por %p92, %p93
      %p95 = scmp.ne.s32.totalorder %s87, %s90
      %p96 = scmp.eq.s32.totalorder %s9, 0
      %p97 = por %p95, %p96
      %p98 = scmp.ne.s32.totalorder %s87, %s90
      %p99 = scmp.eq.s32.totalorder %s14, 4
      %p100 = por %p98, %p99
      %p101 = scmp.ne.s32.totalorder %s90, %s91
      %p102 = scmp.eq.s32.totalorder %s14, 0
      %p103 = por %p101, %p102
      %p104 = scmp.ne.s32.totalorder %s90, %s91
      %p105 = scmp.eq.s32.totalorder %s15, 4
      %p106 = por %p104, %p105
      %p108 = scmp.ne.s32.totalorder %s91, %s107
      %p109 = scmp.eq.s32.totalorder %s15, 0
      %p110 = por %p108, %p109
      %p111 = scmp.le.s32.totalorder 1, %s9
      %p112 = scmp.lt.s32.totalorder %s9, 6
      %p113 = pnand %p111, %p112
      %p114 = pneg %p113
      // Predicated region
      $region9: #{conv_trans_uint_to_odd_forward.3} parent=5 // pred_check
        _
      $region10: #{conv_trans_uint_to_odd_forward.3} parent=5 // pred_check_branch
        %116 = sbr.rel (%p113) target = $region12
      $region11: #{conv_trans_uint_to_odd_forward.3} parent=5 // pred_region
        %s117 = ssub.s32 %s9, 1
        // Predicated region
        $region13: #{conv_trans_uint_to_odd_forward.3} parent=11 // pred_check
          %p118 = pneg %p56
        $region14: #{conv_trans_uint_to_odd_forward.3} parent=11 // pred_check_branch
          %120 = sbr.rel (%p118) target = $region16
        $region15: #{conv_trans_uint_to_odd_forward.3} parent=11 // pred_region
          _
        $region16: #{conv_trans_uint_to_odd_forward.3} parent=11 // pred_fallthru
          _
        // Predicated region
        $region17: #{conv_trans_uint_to_odd_forward.3} parent=11 // pred_check
          %p121 = pneg %p77
        $region18: #{conv_trans_uint_to_odd_forward.3} parent=11 // pred_check_branch
          %123 = sbr.rel (%p121) target = $region20
        $region19: #{conv_trans_uint_to_odd_forward.3} parent=11 // pred_region
          _
        $region20: #{conv_trans_uint_to_odd_forward.3} parent=11 // pred_fallthru
          _
      $region12: #{conv_trans_uint_to_odd_forward.3} parent=5 // pred_fallthru
        _
      %p124 = scmp.lt.s32.totalorder %s9, 5
      // Predicated region
      $region21: #{conv_trans_uint_to_odd_forward.3} parent=5 // pred_check
        %p125 = pneg %p124
      $region22: #{conv_trans_uint_to_odd_forward.3} parent=5 // pred_check_branch
        %127 = sbr.rel (%p125) target = $region24
      $region23: #{conv_trans_uint_to_odd_forward.3} parent=5 // pred_region
        // Predicated region
        $region25: #{conv_trans_uint_to_odd_forward.3} parent=23 // pred_check
          %p128 = pneg %p29
        $region26: #{conv_trans_uint_to_odd_forward.3} parent=23 // pred_check_branch
          %130 = sbr.rel (%p128) target = $region28
        $region27: #{conv_trans_uint_to_odd_forward.3} parent=23 // pred_region
          %s131 = sand.u32 %s19, 1
          %s132 = sand.u32 %s19, 1
          %s133 = smul.addr %s132, 8
          %s134 = scalar_lea.vmem [#allocation2], %s133
          %s135 = smul.addr %s9, 4
          %s136 = scalar_lea.vmem %s0, %s135
          // Predicated region
          $region29: #{conv_trans_uint_to_odd_forward.3} parent=27 // pred_check
            _
          $region30: #{conv_trans_uint_to_odd_forward.3} parent=27 // pred_check_branch
            %138 = sbr.rel (0) target = $region32
          $region31: #{conv_trans_uint_to_odd_forward.3} parent=27 // pred_region
            // Predicated region
            $region33: #{conv_trans_uint_to_odd_forward.3} parent=31 // pred_check
              _
            $region34: #{conv_trans_uint_to_odd_forward.3} parent=31 // pred_check_branch
              %140 = sbr.rel target = $region36
            $region35: #{conv_trans_uint_to_odd_forward.3} parent=31 // pred_region
              // Predicated region
              $region48: #{conv_trans_uint_to_odd_forward.3} parent=35 // pred_check
                _
              $region49: #{conv_trans_uint_to_odd_forward.3} parent=35 // pred_check_branch
                %157 = sbr.rel (0) target = $region51
              $region50: #{conv_trans_uint_to_odd_forward.3} parent=35 // pred_region
                loop: start=0, step=1, limit=1
                $region52: #{conv_trans_uint_to_odd_forward.3} parent=50 // loop_pre_header
                  _
                $region53: #{conv_trans_uint_to_odd_forward.3} parent=50 // loop_header
                  %s159 = sphi 0, %s163
                  %p160 = scmp.ge.s32.totalorder %s159, 1
                  %s164 = sphi %s136, %s136
                  %s165 = sphi %s134, %s134
                $region54: #{conv_trans_uint_to_odd_forward.3} parent=50 // loop_header_branch
                  %162 = sbr.rel (%p160) target = $region58
                $region55: #{conv_trans_uint_to_odd_forward.3} parent=50 // loop_body
                  _
                $region56: #{conv_trans_uint_to_odd_forward.3} parent=50 // loop_footer
                  %s163 = sadd.s32 1, %s159
                $region57: #{conv_trans_uint_to_odd_forward.3} parent=50 // loop_footer_branch
                  %158 = sbr.rel target = $region53
                $region58: #{conv_trans_uint_to_odd_forward.3} parent=50 // loop_exit
                  _
                loop: start=0, step=1, limit=1
                $region59: #{conv_trans_uint_to_odd_forward.3} parent=50 // loop_pre_header
                  _
                $region60: #{conv_trans_uint_to_odd_forward.3} parent=50 // loop_header
                  %s168 = sphi 0, %s172
                  %p169 = scmp.ge.s32.totalorder %s168, 1
                  %s173 = sphi %s136, %s136
                  %s174 = sphi %s134, %s134
                $region61: #{conv_trans_uint_to_odd_forward.3} parent=50 // loop_header_branch
                  %171 = sbr.rel (%p169) target = $region65
                $region62: #{conv_trans_uint_to_odd_forward.3} parent=50 // loop_body
                  %v175 = vld [vmem:[%s173] sm:$0xf]
                  %176 = vst [vmem:[%s174] sm:$0xf] %v175
                  %v177 = vld [vmem:[%s173 + $0x14] sm:$0xf]
                  %178 = vst [vmem:[%s174 + $0x4] sm:$0xf] %v177
                $region63: #{conv_trans_uint_to_odd_forward.3} parent=50 // loop_footer
                  %s172 = sadd.s32 1, %s168
                $region64: #{conv_trans_uint_to_odd_forward.3} parent=50 // loop_footer_branch
                  %167 = sbr.rel target = $region60
                $region65: #{conv_trans_uint_to_odd_forward.3} parent=50 // loop_exit
                  _
              $region51: #{conv_trans_uint_to_odd_forward.3} parent=35 // pred_fallthru
                _
            $region36: #{conv_trans_uint_to_odd_forward.3} parent=31 // pred_fallthru
              _
            // Predicated region
            $region37: #{conv_trans_uint_to_odd_forward.3} parent=31 // pred_check
              _
            $region38: #{conv_trans_uint_to_odd_forward.3} parent=31 // pred_check_branch
              %142 = sbr.rel (0) target = $region40
            $region39: #{conv_trans_uint_to_odd_forward.3} parent=31 // pred_region
              loop: start=0, step=1, limit=1
              $region41: #{conv_trans_uint_to_odd_forward.3} parent=39 // loop_pre_header
                _
              $region42: #{conv_trans_uint_to_odd_forward.3} parent=39 // loop_header
                %s145 = sphi 0, %s149
                %p146 = scmp.ge.s32.totalorder %s145, 1
                %s150 = sphi %s136, %s136
                %s151 = sphi %s134, %s134
              $region43: #{conv_trans_uint_to_odd_forward.3} parent=39 // loop_header_branch
                %148 = sbr.rel (%p146) target = $region47
              $region44: #{conv_trans_uint_to_odd_forward.3} parent=39 // loop_body
                %v152 = vld [vmem:[%s150] sm:$0xf]
                %153 = vst [vmem:[%s151] sm:$0xf] %v152
                %v154 = vld [vmem:[%s150 + $0x14] sm:$0xf]
                %155 = vst [vmem:[%s151 + $0x4] sm:$0xf] %v154
              $region45: #{conv_trans_uint_to_odd_forward.3} parent=39 // loop_footer
                %s149 = sadd.s32 1, %s145
              $region46: #{conv_trans_uint_to_odd_forward.3} parent=39 // loop_footer_branch
                %144 = sbr.rel target = $region42
              $region47: #{conv_trans_uint_to_odd_forward.3} parent=39 // loop_exit
                _
            $region40: #{conv_trans_uint_to_odd_forward.3} parent=31 // pred_fallthru
              _
          $region32: #{conv_trans_uint_to_odd_forward.3} parent=27 // pred_fallthru
            _
          %179 = vnop
        $region28: #{conv_trans_uint_to_odd_forward.3} parent=23 // pred_fallthru
          _
      $region24: #{conv_trans_uint_to_odd_forward.3} parent=5 // pred_fallthru
        _
      %p180 = scmp.le.s32.totalorder 1, %s9
      %p181 = scmp.lt.s32.totalorder %s9, 6
      %p182 = pnand %p180, %p181
      %p183 = pneg %p182
      // Predicated region
      $region66: #{conv_trans_uint_to_odd_forward.3} parent=5 // pred_check
        _
      $region67: #{conv_trans_uint_to_odd_forward.3} parent=5 // pred_check_branch
        %185 = sbr.rel (%p182) target = $region69
      $region68: #{conv_trans_uint_to_odd_forward.3} parent=5 // pred_region
        %s186 = ssub.s32 %s9, 1
        %s187 = sand.u32 %s22, 1
        %s188 = sand.u32 %s22, 1
        %s189 = smul.addr %s188, 8
        %s190 = scalar_lea.vmem [#allocation2], %s189
        // Predicated region
        $region70: #{conv_trans_uint_to_odd_forward.3} parent=68 // pred_check
          %p191 = pneg %p35
        $region71: #{conv_trans_uint_to_odd_forward.3} parent=68 // pred_check_branch
          %193 = sbr.rel (%p191) target = $region73
        $region72: #{conv_trans_uint_to_odd_forward.3} parent=68 // pred_region
          _
        $region73: #{conv_trans_uint_to_odd_forward.3} parent=68 // pred_fallthru
          _
        %s194 = sand.u32 %s22, 1
        %s195 = sand.u32 %s22, 1
        %s196 = smul.addr %s195, 8
        %s197 = scalar_lea.vmem [#allocation2], %s196
        %p198 = pneg %p35
        %p199 = pneg %p32
        %p200 = pneg %p56
        %p201 = pneg %p53
        %p202 = pneg %p77
        %p203 = pneg %p74
        %p204 = pneg %p103
        %p205 = pneg %p100
        %s206 = sand.u32 %s90, 1
        %s207 = sand.u32 %s90, 1
        %s208 = smul.addr %s207, 16
        %s209 = scalar_lea.vmem [#allocation3], %s208
        %v211 = vld [vmem:[%s1] sm:$0xf]
        %v212 = vld [vmem:[%s1 + $0x4] sm:$0xf]
        %v213 = vld [vmem:[%s1 + $0x8] sm:$0xf]
        %v214 = vld [vmem:[%s1 + $0xc] sm:$0xf]
        %v215 = vld [vmem:[%s1 + $0x10] sm:$0xf]
        %v216 = vld [vmem:[%s1 + $0x14] sm:$0xf]
        %v217 = vld [vmem:[%s1 + $0x18] sm:$0xf]
        %v218 = vld [vmem:[%s1 + $0x1c] sm:$0xf]
        %v219 = vld [vmem:[%s190] sm:$0xf]
        %v220 = vld [vmem:[%s190 + $0x4] sm:$0xf]
        %v229 = vunpack.c.l.b16 %v211
        %v230 = vunpack.c.l.b16 %v212
        %v231 = vunpack.c.l.b16 %v213
        %v232 = vunpack.c.l.b16 %v214
        %v233 = vunpack.c.l.b16 %v215
        %v234 = vunpack.c.l.b16 %v216
        %v235 = vunpack.c.l.b16 %v217
        %v236 = vunpack.c.l.b16 %v218
        %v237 = vpack.c.b16 %v230, %v229
        %v238 = vpack.c.b16 %v232, %v231
        %v239 = vpack.c.b16 %v234, %v233
        %v240 = vpack.c.b16 %v236, %v235
        %v243 = vunpack.c.l.b16 %v219
        %v244 = vunpack.c.l.b16 %v220
        %v245 = vpack.c.b16 %v244, %v243
        %vm247 = vcmask 130048
        %v249 = vsel %vm247, %v237, 0
        %v252 = vsel %vm247, %v238, 0
        %v255 = vsel %vm247, %v239, 0
        %v258 = vsel %vm247, %v240, 0
        %260 = vmatprep.subr.bf16.mxu0 0
        %261 = vmatpush1.bf16.msra.mxu0 %v245
        %262 = vmatprep.subr.bf16.mxu0 0
        %263 = vmatpush1.bf16.msra.mxu0 0
        %264 = vmatprep.subr.bf16.mxu0 0
        %265 = vmatpush1.bf16.msra.mxu0 0
        %266 = vmatprep.subr.bf16.mxu0 0
        %267 = vmatpush1.bf16.msra.mxu0 0
        %268 = vmatprep.subr.bf16.mxu0 0
        %269 = vmatpush1.bf16.msra.mxu0 0
        %270 = vmatprep.subr.bf16.mxu0 0
        %271 = vmatpush1.bf16.msra.mxu0 0
        %272 = vmatprep.subr.bf16.mxu0 0
        %273 = vmatpush1.bf16.msra.mxu0 0
        %274 = vmatprep.subr.bf16.mxu0 0
        %275 = vmatpush1.bf16.msra.mxu0 0
        %276 = vmatprep.subr.bf16.mxu0 0
        %277 = vmatpush1.bf16.msra.mxu0 0
        %278 = vmatprep.subr.bf16.mxu0 0
        %279 = vmatpush1.bf16.msra.mxu0 0
        %280 = vmatprep.subr.bf16.mxu0 0
        %281 = vmatpush1.bf16.msra.mxu0 0
        %282 = vmatprep.subr.bf16.mxu0 0
        %283 = vmatpush1.bf16.msra.mxu0 0
        %284 = vmatprep.subr.bf16.mxu0 0
        %285 = vmatpush1.bf16.msra.mxu0 0
        %286 = vmatprep.subr.bf16.mxu0 0
        %287 = vmatpush1.bf16.msra.mxu0 0
        %288 = vmatprep.subr.bf16.mxu0 0
        %289 = vmatpush1.bf16.msra.mxu0 0
        %290 = vmatprep.subr.bf16.mxu0 0
        %291 = vmatpush1.bf16.msra.mxu0 0
        %292 = vmatprep.mubr.bf16.mxu0 0
        %293 = vmatmul.mubr.bf16.gmra.mrb[0].mxu0 %v249
        %v294 = vpop.f32.mrb[0].mxu0
        %v295 = vadd.f32 0.0, %v294
        %v296 = vpop.f32.mrb[0].mxu0
        %v297 = vpop.f32.mrb[0].mxu0
        %v298 = vadd.f32 0.0, %v297
        %v299 = vpop.f32.mrb[0].mxu0
        %300 = vmatprep.mubr.bf16.mxu0 0
        %301 = vmatmul.mubr.bf16.gmra.mrb[0].mxu0 %v252
        %v302 = vpop.f32.mrb[0].mxu0
        %v303 = vadd.f32 0.0, %v302
        %v304 = vpop.f32.mrb[0].mxu0
        %v305 = vpop.f32.mrb[0].mxu0
        %v306 = vadd.f32 0.0, %v305
        %v307 = vpop.f32.mrb[0].mxu0
        %308 = vmatprep.mubr.bf16.mxu0 0
        %309 = vmatmul.mubr.bf16.gmra.mrb[0].mxu0 %v255
        %v310 = vpop.f32.mrb[0].mxu0
        %v311 = vadd.f32 0.0, %v310
        %v312 = vpop.f32.mrb[0].mxu0
        %v313 = vpop.f32.mrb[0].mxu0
        %v314 = vadd.f32 0.0, %v313
        %v315 = vpop.f32.mrb[0].mxu0
        %316 = vmatprep.mubr.bf16.mxu0 0
        %317 = vmatmul.mubr.bf16.gmra.mrb[0].mxu0 %v258
        %v318 = vpop.f32.mrb[0].mxu0
        %v319 = vadd.f32 0.0, %v318
        %v320 = vpop.f32.mrb[0].mxu0
        %v321 = vpop.f32.mrb[0].mxu0
        %v322 = vadd.f32 0.0, %v321
        %v323 = vpop.f32.mrb[0].mxu0
        %324 = vdwg.mxu0
        %v325 = vadd.f32 %v295, %v311
        %v326 = vadd.f32 %v298, %v314
        %v327 = vadd.f32 %v303, %v319
        %v328 = vadd.f32 %v306, %v322
        %v329 = vld [vmem:[%s2] sm:$0xff]
        %v330 = vld [vmem:[%s2 + $0x8] sm:$0xff]
        %v331 = vld [vmem:[%s2 + $0x10] sm:$0xff]
        %v332 = vld [vmem:[%s2 + $0x18] sm:$0xff]
        %334 = vset.pattern.permute.xlu0 0
        %335 = vperm.xlu0 %334, %v329
        %v336 = vpop.permute.xlu0 %335
        %339 = vset.pattern.permute.xlu0 0
        %340 = vperm.xlu0 %339, %v330
        %v341 = vpop.permute.xlu0 %340
        %344 = vset.pattern.permute.xlu0 0
        %345 = vperm.xlu0 %344, %v331
        %v346 = vpop.permute.xlu0 %345
        %349 = vset.pattern.permute.xlu0 0
        %350 = vperm.xlu0 %349, %v332
        %v351 = vpop.permute.xlu0 %350
        %v353 = vadd.f32 %v325, %v336
        %v354 = vadd.f32 %v326, %v341
        %v355 = vadd.f32 %v327, %v346
        %v356 = vadd.f32 %v328, %v351
        %v357 = vmax.f32 %v353, 0.0
        %v358 = vmax.f32 %v354, 0.0
        %v359 = vmax.f32 %v355, 0.0
        %v360 = vmax.f32 %v356, 0.0
        %v361 = vpack.c.bf16 %v358, %v357
        %v362 = vpack.c.bf16 %v360, %v359
        %v365 = vunpack.c.l.b16 %v361
        %v366 = vunpack.c.h.b16 %v361
        %v367 = vunpack.c.l.b16 %v362
        %v368 = vunpack.c.h.b16 %v362
        %v369 = vpack.c.b16 %v365, %v365
        %v370 = vpack.c.b16 %v366, %v366
        %v371 = vpack.c.b16 %v367, %v367
        %v372 = vpack.c.b16 %v368, %v368
        %377 = vst [vmem:[%s209] sm:$0xf] %v369
        %378 = vst [vmem:[%s209 + $0x4] sm:$0xf] %v370
        %379 = vst [vmem:[%s209 + $0x8] sm:$0xf] %v371
        %380 = vst [vmem:[%s209 + $0xc] sm:$0xf] %v372
        %s381 = sand.u32 %s90, 1
        %s382 = sand.u32 %s90, 1
        %s383 = smul.addr %s382, 16
        %s384 = scalar_lea.vmem [#allocation3], %s383
        // Predicated region
        $region74: #{conv_trans_uint_to_odd_forward.3} parent=68 // pred_check
          %p385 = pneg %p100
        $region75: #{conv_trans_uint_to_odd_forward.3} parent=68 // pred_check_branch
          %387 = sbr.rel (%p385) target = $region77
        $region76: #{conv_trans_uint_to_odd_forward.3} parent=68 // pred_region
          %s388 = smul.addr %s14, 4
          %s389 = scalar_lea.vmem %s3, %s388
          // Predicated region
          $region78: #{conv_trans_uint_to_odd_forward.3} parent=76 // pred_check
            _
          $region79: #{conv_trans_uint_to_odd_forward.3} parent=76 // pred_check_branch
            %391 = sbr.rel (0) target = $region81
          $region80: #{conv_trans_uint_to_odd_forward.3} parent=76 // pred_region
            // Predicated region
            $region82: #{conv_trans_uint_to_odd_forward.3} parent=80 // pred_check
              _
            $region83: #{conv_trans_uint_to_odd_forward.3} parent=80 // pred_check_branch
              %393 = sbr.rel target = $region85
            $region84: #{conv_trans_uint_to_odd_forward.3} parent=80 // pred_region
              // Predicated region
              $region97: #{conv_trans_uint_to_odd_forward.3} parent=84 // pred_check
                _
              $region98: #{conv_trans_uint_to_odd_forward.3} parent=84 // pred_check_branch
                %414 = sbr.rel (0) target = $region100
              $region99: #{conv_trans_uint_to_odd_forward.3} parent=84 // pred_region
                loop: start=0, step=1, limit=1
                $region101: #{conv_trans_uint_to_odd_forward.3} parent=99 // loop_pre_header
                  _
                $region102: #{conv_trans_uint_to_odd_forward.3} parent=99 // loop_header
                  %s416 = sphi 0, %s420
                  %p417 = scmp.ge.s32.totalorder %s416, 1
                  %s421 = sphi %s384, %s384
                  %s422 = sphi %s389, %s389
                $region103: #{conv_trans_uint_to_odd_forward.3} parent=99 // loop_header_branch
                  %419 = sbr.rel (%p417) target = $region107
                $region104: #{conv_trans_uint_to_odd_forward.3} parent=99 // loop_body
                  _
                $region105: #{conv_trans_uint_to_odd_forward.3} parent=99 // loop_footer
                  %s420 = sadd.s32 1, %s416
                $region106: #{conv_trans_uint_to_odd_forward.3} parent=99 // loop_footer_branch
                  %415 = sbr.rel target = $region102
                $region107: #{conv_trans_uint_to_odd_forward.3} parent=99 // loop_exit
                  _
                loop: start=0, step=1, limit=1
                $region108: #{conv_trans_uint_to_odd_forward.3} parent=99 // loop_pre_header
                  _
                $region109: #{conv_trans_uint_to_odd_forward.3} parent=99 // loop_header
                  %s425 = sphi 0, %s429
                  %p426 = scmp.ge.s32.totalorder %s425, 1
                  %s430 = sphi %s384, %s384
                  %s431 = sphi %s389, %s389
                $region110: #{conv_trans_uint_to_odd_forward.3} parent=99 // loop_header_branch
                  %428 = sbr.rel (%p426) target = $region114
                $region111: #{conv_trans_uint_to_odd_forward.3} parent=99 // loop_body
                  %v432 = vld [vmem:[%s430] sm:$0xf]
                  %433 = vst [vmem:[%s431] sm:$0xf] %v432
                  %v434 = vld [vmem:[%s430 + $0x4] sm:$0xf]
                  %435 = vst [vmem:[%s431 + $0x14] sm:$0xf] %v434
                  %v436 = vld [vmem:[%s430 + $0x8] sm:$0xf]
                  %437 = vst [vmem:[%s431 + $0x28] sm:$0xf] %v436
                  %v438 = vld [vmem:[%s430 + $0xc] sm:$0xf]
                  %439 = vst [vmem:[%s431 + $0x3c] sm:$0xf] %v438
                $region112: #{conv_trans_uint_to_odd_forward.3} parent=99 // loop_footer
                  %s429 = sadd.s32 1, %s425
                $region113: #{conv_trans_uint_to_odd_forward.3} parent=99 // loop_footer_branch
                  %424 = sbr.rel target = $region109
                $region114: #{conv_trans_uint_to_odd_forward.3} parent=99 // loop_exit
                  _
              $region100: #{conv_trans_uint_to_odd_forward.3} parent=84 // pred_fallthru
                _
            $region85: #{conv_trans_uint_to_odd_forward.3} parent=80 // pred_fallthru
              _
            // Predicated region
            $region86: #{conv_trans_uint_to_odd_forward.3} parent=80 // pred_check
              _
            $region87: #{conv_trans_uint_to_odd_forward.3} parent=80 // pred_check_branch
              %395 = sbr.rel (0) target = $region89
            $region88: #{conv_trans_uint_to_odd_forward.3} parent=80 // pred_region
              loop: start=0, step=1, limit=1
              $region90: #{conv_trans_uint_to_odd_forward.3} parent=88 // loop_pre_header
                _
              $region91: #{conv_trans_uint_to_odd_forward.3} parent=88 // loop_header
                %s398 = sphi 0, %s402
                %p399 = scmp.ge.s32.totalorder %s398, 1
                %s403 = sphi %s384, %s384
                %s404 = sphi %s389, %s389
              $region92: #{conv_trans_uint_to_odd_forward.3} parent=88 // loop_header_branch
                %401 = sbr.rel (%p399) target = $region96
              $region93: #{conv_trans_uint_to_odd_forward.3} parent=88 // loop_body
                %v405 = vld [vmem:[%s403] sm:$0xf]
                %406 = vst [vmem:[%s404] sm:$0xf] %v405
                %v407 = vld [vmem:[%s403 + $0x4] sm:$0xf]
                %408 = vst [vmem:[%s404 + $0x14] sm:$0xf] %v407
                %v409 = vld [vmem:[%s403 + $0x8] sm:$0xf]
                %410 = vst [vmem:[%s404 + $0x28] sm:$0xf] %v409
                %v411 = vld [vmem:[%s403 + $0xc] sm:$0xf]
                %412 = vst [vmem:[%s404 + $0x3c] sm:$0xf] %v411
              $region94: #{conv_trans_uint_to_odd_forward.3} parent=88 // loop_footer
                %s402 = sadd.s32 1, %s398
              $region95: #{conv_trans_uint_to_odd_forward.3} parent=88 // loop_footer_branch
                %397 = sbr.rel target = $region91
              $region96: #{conv_trans_uint_to_odd_forward.3} parent=88 // loop_exit
                _
            $region89: #{conv_trans_uint_to_odd_forward.3} parent=80 // pred_fallthru
              _
          $region81: #{conv_trans_uint_to_odd_forward.3} parent=76 // pred_fallthru
            _
          %440 = vnop
        $region77: #{conv_trans_uint_to_odd_forward.3} parent=68 // pred_fallthru
          _
      $region69: #{conv_trans_uint_to_odd_forward.3} parent=5 // pred_fallthru
        _
      %p441 = scmp.le.s32.totalorder 2, %s9
      // Predicated region
      $region115: #{conv_trans_uint_to_odd_forward.3} parent=5 // pred_check
        %p442 = pneg %p441
      $region116: #{conv_trans_uint_to_odd_forward.3} parent=5 // pred_check_branch
        %444 = sbr.rel (%p442) target = $region118
      $region117: #{conv_trans_uint_to_odd_forward.3} parent=5 // pred_region
        %s445 = ssub.s32 %s9, 2
        // Predicated region
        $region119: #{conv_trans_uint_to_odd_forward.3} parent=117 // pred_check
          %p446 = pneg %p106
        $region120: #{conv_trans_uint_to_odd_forward.3} parent=117 // pred_check_branch
          %448 = sbr.rel (%p446) target = $region122
        $region121: #{conv_trans_uint_to_odd_forward.3} parent=117 // pred_region
          %s449 = sand.u32 %s91, 1
          %s450 = sand.u32 %s91, 1
          %s451 = smul.addr %s450, 16
          %s452 = scalar_lea.vmem [#allocation3], %s451
        $region122: #{conv_trans_uint_to_odd_forward.3} parent=117 // pred_fallthru
          _
      $region118: #{conv_trans_uint_to_odd_forward.3} parent=5 // pred_fallthru
        _
    $region6: #{conv_trans_uint_to_odd_forward.3} parent=1 // loop_footer
      %s13 = sadd.s32 1, %s9
    $region7: #{conv_trans_uint_to_odd_forward.3} parent=1 // loop_footer_branch
      %8 = sbr.rel target = $region3
    $region8: #{conv_trans_uint_to_odd_forward.3} parent=1 // loop_exit
      _

</llo_original>
